<compile_context>
chip_gen: v7x
topology: tpu7x:2x2x1
jax: 0.10.0
libtpu: 0.0.40
codegen_flags: <defaults>
</compile_context>

<pallas_src>
import jax
import jax.numpy as jnp
from jax.experimental import pallas as pl
from jax.experimental.pallas import tpu as pltpu

_IN = 24     # input features
_HID = 128   # hidden width padded 72 -> 128 (one full lane tile)


def deep_mlp_kernel(x_ref,
                    w1_ref, b1_ref,
                    w2_ref, b2_ref,
                    w3_ref, b3_ref,
                    w4_ref, b4_ref,
                    o_ref):
    # Hidden matmuls: bf16 on the MXU, f32 accumulation; bias/ReLU in f32.
    x = x_ref[...]                                                       # (TB, 24) bf16
    h = jnp.dot(x, w1_ref[...], preferred_element_type=jnp.float32) + b1_ref[...]
    h = jnp.maximum(h, 0.0)                                              # (TB, 128) f32

    h = jnp.dot(h.astype(jnp.bfloat16), w2_ref[...],
                preferred_element_type=jnp.float32) + b2_ref[...]
    h = jnp.maximum(h, 0.0)

    h = jnp.dot(h.astype(jnp.bfloat16), w3_ref[...],
                preferred_element_type=jnp.float32) + b3_ref[...]
    h = jnp.maximum(h, 0.0)

    # Final (128 -> 1) layer off the MXU: VPU multiply + XLU lane reduction.
    z = jnp.sum(h * w4_ref[...], axis=-1, keepdims=True) + b4_ref[...]   # (TB, 1) f32

    # Sigmoid via a single EUP tanh: sigmoid(z) = 0.5 * (1 + tanh(z / 2)).
    o_ref[...] = 0.5 * (1.0 + jnp.tanh(0.5 * z))                         # (TB, 1) f32


def _round_up(n, m):
    return ((n + m - 1) // m) * m


def _pad_params(params):
    """Zero-pad hidden dims 72 -> 128; store MXU weights in bf16."""
    p = _HID - 72
    w1 = jnp.pad(params["w1"], ((0, 0), (0, p))).astype(jnp.bfloat16)   # (24, 128)
    b1 = jnp.pad(params["b1"], ((0, 0), (0, p)))                        # (1, 128) f32
    w2 = jnp.pad(params["w2"], ((0, p), (0, p))).astype(jnp.bfloat16)   # (128, 128)
    b2 = jnp.pad(params["b2"], ((0, 0), (0, p)))                        # (1, 128) f32
    w3 = jnp.pad(params["w3"], ((0, p), (0, p))).astype(jnp.bfloat16)   # (128, 128)
    b3 = jnp.pad(params["b3"], ((0, 0), (0, p)))                        # (1, 128) f32
    w4 = jnp.pad(params["w4"].T, ((0, 0), (0, p)))                      # (1, 128) f32 (row)
    b4 = params["b4"]                                                   # (1, 1)  f32
    return w1, b1, w2, b2, w3, b3, w4, b4


def _pick_tiling(B):
    """Return (padded_batch, batch_tile)."""
    bp = _round_up(max(B, 1), 8)
    if bp >= 4096:
        tb = 2048
    elif bp >= 1024:
        tb = 1024
    elif bp >= 256:
        # Keep >= 2 grid steps so both v7x TensorCores get work; multiple of
        # 16 keeps the bf16 activation tile sublane-aligned.
        tb = _round_up(bp // 2, 16)
    else:
        tb = bp   # single tile == full-array blocks
    return _round_up(bp, tb), tb


def deep_forward(x, params):
    """x: (B, 24) float32. params: dict of (in,out) weights and (1,out) biases."""
    B, fin = x.shape
    assert fin == _IN
    bp, tb = _pick_tiling(B)
    xp = jnp.pad(x, ((0, bp - B), (0, 0))) if bp != B else x
    xp = xp.astype(jnp.bfloat16)          # halves input HBM traffic; MXU is bf16 anyway

    weights = _pad_params(params)
    operands = (xp,) + tuple(weights)

    # x tile walks the batch; weights/biases keep block index (0, 0) so Pallas
    # keeps them resident in VMEM across grid iterations (no re-DMA).
    def resident(arr):
        nd = arr.ndim
        return pl.BlockSpec(arr.shape, lambda i, _nd=nd: (0,) * _nd)

    in_specs = [pl.BlockSpec((tb, fin), lambda i: (i, 0))]
    in_specs += [resident(w) for w in weights]
    out_spec = pl.BlockSpec((tb, 1), lambda i: (i, 0))

    # Honest cost for the padded shapes actually executed.
    flops = 2 * bp * (_IN * _HID + 2 * _HID * _HID + _HID)
    weight_bytes = sum(int(w.size) * int(w.dtype.itemsize) for w in weights)
    cost = pl.CostEstimate(
        flops=flops,
        transcendentals=bp,
        bytes_accessed=bp * fin * 2 + bp * 4 + weight_bytes,
    )

    out = pl.pallas_call(
        deep_mlp_kernel,
        out_shape=jax.ShapeDtypeStruct((bp, 1), jnp.float32),
        grid=(bp // tb,),
        in_specs=in_specs,
        out_specs=out_spec,
        compiler_params=pltpu.CompilerParams(
            dimension_semantics=("parallel",)),
        cost_estimate=cost,
    )(*operands)

    return out[:B] if bp != B else out


def init_params(key):
    """Deterministic init matching the PyTorch layer shapes (weights stored
    as (in_features, out_features), i.e. transposed vs. torch)."""
    dims = [(24, 72), (72, 72), (72, 72), (72, 1)]
    params = {}
    for i, (fin, fout) in enumerate(dims, start=1):
        key, kw, kb = jax.random.split(key, 3)
        bound = 1.0 / jnp.sqrt(fin)  # same scale as torch.nn.Linear default
        params[f"w{i}"] = jax.random.uniform(
            kw, (fin, fout), jnp.float32, minval=-bound, maxval=bound)
        params[f"b{i}"] = jax.random.uniform(
            kb, (1, fout), jnp.float32, minval=-bound, maxval=bound)
    return params


def reference_forward(x, params, dtype=jnp.float32):
    """Plain-JAX reference.  dtype=bfloat16 mirrors the kernel's MXU precision."""
    def dense(a, w, b):
        return jnp.dot(a.astype(dtype), w.astype(dtype),
                       preferred_element_type=jnp.float32) + b
    h = jnp.maximum(dense(x, params["w1"], params["b1"]), 0.0)
    h = jnp.maximum(dense(h, params["w2"], params["b2"]), 0.0)
    h = jnp.maximum(dense(h, params["w3"], params["b3"]), 0.0)
    z = h @ params["w4"] + params["b4"]           # final layer stays f32 (as in kernel)
    return 1.0 / (1.0 + jnp.exp(-z))


if __name__ == "__main__":
    key = jax.random.PRNGKey(0)
    key, kx, kx2 = jax.random.split(key, 3)
    params = init_params(key)

    fwd = jax.jit(deep_forward)

    # Small single-tile case (B=8).
    B = 8
    x = jax.random.normal(kx, (B, _IN), dtype=jnp.float32)
    out = jax.block_until_ready(fwd(x, params))
    assert out.shape == (B, 1)
    ref_bf = reference_forward(x, params, dtype=jnp.bfloat16)
    ref_f32 = reference_forward(x, params, dtype=jnp.float32)
    assert jnp.allclose(out, ref_bf, atol=1e-3), "mismatch vs bf16-matched reference"
    assert jnp.allclose(out, ref_f32, atol=2e-2), "mismatch vs f32 reference"

    # Multi-step grid: B=300 -> 2 grid steps, batch padding, resident weights.
    B2 = 300
    x2 = jax.random.normal(kx2, (B2, _IN), dtype=jnp.float32)
    out2 = jax.block_until_ready(fwd(x2, params))
    assert out2.shape == (B2, 1)
    ref_bf2 = reference_forward(x2, params, dtype=jnp.bfloat16)
    ref_f32_2 = reference_forward(x2, params, dtype=jnp.float32)
    assert jnp.allclose(out2, ref_bf2, atol=1e-3)
    assert jnp.allclose(out2, ref_f32_2, atol=2e-2)

    print("KERNEL_OK")
</pallas_src>

<mosaic_0001>
module attributes {stable_mosaic.version = 11 : i64} {
  func.func @deep_mlp_kernel(%arg0: i32, %arg1: memref<8x24xbf16, #tpu.memory_space<vmem>>, %arg2: memref<24x128xbf16, #tpu.memory_space<vmem>>, %arg3: memref<1x128xf32, #tpu.memory_space<vmem>>, %arg4: memref<128x128xbf16, #tpu.memory_space<vmem>>, %arg5: memref<1x128xf32, #tpu.memory_space<vmem>>, %arg6: memref<128x128xbf16, #tpu.memory_space<vmem>>, %arg7: memref<1x128xf32, #tpu.memory_space<vmem>>, %arg8: memref<1x128xf32, #tpu.memory_space<vmem>>, %arg9: memref<1x1xf32, #tpu.memory_space<vmem>>, %arg10: memref<8x1xf32, #tpu.memory_space<vmem>>) attributes {dimension_semantics = [#tpu.dimension_semantics<parallel>], iteration_bounds = array<i64: 1>, scalar_prefetch = 0 : i64, scratch_operands = 0 : i64, tpu.core_type = #tpu.core_type<tc>, window_params = [{transform_indices = @transform_0, window_bounds = array<i64: 8, 24>}, {pipeline_mode = #tpu.pipeline_mode<synchronous>, transform_indices = @transform_1, window_bounds = array<i64: 24, 128>}, {pipeline_mode = #tpu.pipeline_mode<synchronous>, transform_indices = @transform_2, window_bounds = array<i64: 1, 128>}, {pipeline_mode = #tpu.pipeline_mode<synchronous>, transform_indices = @transform_3, window_bounds = array<i64: 128, 128>}, {pipeline_mode = #tpu.pipeline_mode<synchronous>, transform_indices = @transform_4, window_bounds = array<i64: 1, 128>}, {pipeline_mode = #tpu.pipeline_mode<synchronous>, transform_indices = @transform_5, window_bounds = array<i64: 128, 128>}, {pipeline_mode = #tpu.pipeline_mode<synchronous>, transform_indices = @transform_6, window_bounds = array<i64: 1, 128>}, {pipeline_mode = #tpu.pipeline_mode<synchronous>, transform_indices = @transform_7, window_bounds = array<i64: 1, 128>}, {pipeline_mode = #tpu.pipeline_mode<synchronous>, transform_indices = @transform_8, window_bounds = array<i64: 1, 1>}, {transform_indices = @transform_9, window_bounds = array<i64: 8, 1>}]} {
    %c0 = arith.constant 0 : index
    %c0_0 = arith.constant 0 : index
    %0 = vector.load %arg1[%c0, %c0_0] : memref<8x24xbf16, #tpu.memory_space<vmem>>, vector<8x24xbf16>
    %c0_1 = arith.constant 0 : index
    %c0_2 = arith.constant 0 : index
    %1 = vector.load %arg2[%c0_1, %c0_2] : memref<24x128xbf16, #tpu.memory_space<vmem>>, vector<24x128xbf16>
    %cst = arith.constant dense<0.000000e+00> : vector<8x128xf32>
    %2 = tpu.matmul %0, %1, %cst {dimension_numbers = #tpu.dot_dimension_numbers<[1], [0], [0], [1], [0, 0, 1, 1], [], []>} : vector<8x24xbf16>, vector<24x128xbf16>, vector<8x128xf32> -> vector<8x128xf32>
    %c0_3 = arith.constant 0 : index
    %c0_4 = arith.constant 0 : index
    %3 = vector.load %arg3[%c0_3, %c0_4] : memref<1x128xf32, #tpu.memory_space<vmem>>, vector<1x128xf32>
    %4 = vector.broadcast %3 : vector<1x128xf32> to vector<8x128xf32>
    %5 = arith.addf %2, %4 : vector<8x128xf32>
    %cst_5 = arith.constant 0.000000e+00 : f32
    %6 = vector.broadcast %cst_5 : f32 to vector<8x128xf32>
    %7 = arith.maximumf %5, %6 : vector<8x128xf32>
    %8 = arith.truncf %7 : vector<8x128xf32> to vector<8x128xbf16>
    %c0_6 = arith.constant 0 : index
    %c0_7 = arith.constant 0 : index
    %9 = vector.load %arg4[%c0_6, %c0_7] : memref<128x128xbf16, #tpu.memory_space<vmem>>, vector<128x128xbf16>
    %cst_8 = arith.constant dense<0.000000e+00> : vector<8x128xf32>
    %10 = tpu.matmul %8, %9, %cst_8 {dimension_numbers = #tpu.dot_dimension_numbers<[1], [0], [0], [1], [0, 0, 1, 1], [], []>} : vector<8x128xbf16>, vector<128x128xbf16>, vector<8x128xf32> -> vector<8x128xf32>
    %c0_9 = arith.constant 0 : index
    %c0_10 = arith.constant 0 : index
    %11 = vector.load %arg5[%c0_9, %c0_10] : memref<1x128xf32, #tpu.memory_space<vmem>>, vector<1x128xf32>
    %12 = vector.broadcast %11 : vector<1x128xf32> to vector<8x128xf32>
    %13 = arith.addf %10, %12 : vector<8x128xf32>
    %cst_11 = arith.constant 0.000000e+00 : f32
    %14 = vector.broadcast %cst_11 : f32 to vector<8x128xf32>
    %15 = arith.maximumf %13, %14 : vector<8x128xf32>
    %16 = arith.truncf %15 : vector<8x128xf32> to vector<8x128xbf16>
    %c0_12 = arith.constant 0 : index
    %c0_13 = arith.constant 0 : index
    %17 = vector.load %arg6[%c0_12, %c0_13] : memref<128x128xbf16, #tpu.memory_space<vmem>>, vector<128x128xbf16>
    %cst_14 = arith.constant dense<0.000000e+00> : vector<8x128xf32>
    %18 = tpu.matmul %16, %17, %cst_14 {dimension_numbers = #tpu.dot_dimension_numbers<[1], [0], [0], [1], [0, 0, 1, 1], [], []>} : vector<8x128xbf16>, vector<128x128xbf16>, vector<8x128xf32> -> vector<8x128xf32>
    %c0_15 = arith.constant 0 : index
    %c0_16 = arith.constant 0 : index
    %19 = vector.load %arg7[%c0_15, %c0_16] : memref<1x128xf32, #tpu.memory_space<vmem>>, vector<1x128xf32>
    %20 = vector.broadcast %19 : vector<1x128xf32> to vector<8x128xf32>
    %21 = arith.addf %18, %20 : vector<8x128xf32>
    %cst_17 = arith.constant 0.000000e+00 : f32
    %22 = vector.broadcast %cst_17 : f32 to vector<8x128xf32>
    %23 = arith.maximumf %21, %22 : vector<8x128xf32>
    %c0_18 = arith.constant 0 : index
    %c0_19 = arith.constant 0 : index
    %24 = vector.load %arg8[%c0_18, %c0_19] : memref<1x128xf32, #tpu.memory_space<vmem>>, vector<1x128xf32>
    %25 = vector.broadcast %24 : vector<1x128xf32> to vector<8x128xf32>
    %26 = arith.mulf %23, %25 : vector<8x128xf32>
    %cst_20 = arith.constant dense<0.000000e+00> : vector<8xf32>
    %27 = vector.multi_reduction <add>, %26, %cst_20 [1] : vector<8x128xf32> to vector<8xf32>
    %28 = vector.shape_cast %27 : vector<8xf32> to vector<8x1xf32>
    %c0_21 = arith.constant 0 : index
    %c0_22 = arith.constant 0 : index
    %29 = vector.load %arg9[%c0_21, %c0_22] : memref<1x1xf32, #tpu.memory_space<vmem>>, vector<1x1xf32>
    %30 = vector.broadcast %29 : vector<1x1xf32> to vector<8x1xf32>
    %31 = arith.addf %28, %30 : vector<8x1xf32>
    %cst_23 = arith.constant 5.000000e-01 : f32
    %32 = vector.broadcast %cst_23 : f32 to vector<8x1xf32>
    %33 = arith.mulf %32, %31 : vector<8x1xf32>
    %34 = math.tanh %33 : vector<8x1xf32>
    %cst_24 = arith.constant 1.000000e+00 : f32
    %35 = vector.broadcast %cst_24 : f32 to vector<8x1xf32>
    %36 = arith.addf %35, %34 : vector<8x1xf32>
    %cst_25 = arith.constant 5.000000e-01 : f32
    %37 = vector.broadcast %cst_25 : f32 to vector<8x1xf32>
    %38 = arith.mulf %37, %36 : vector<8x1xf32>
    %c0_26 = arith.constant 0 : index
    %c0_27 = arith.constant 0 : index
    %39 = vector.load %arg10[%c0_26, %c0_27] : memref<8x1xf32, #tpu.memory_space<vmem>>, vector<8x1xf32>
    tpu.vector_store %arg10[%c0_26, %c0_27], %38 {strides = array<i32>} : memref<8x1xf32, #tpu.memory_space<vmem>>, vector<8x1xf32>,
    return
  }
  func.func @transform_0(%arg0: i32) -> (i32, i32) {
    %c0_i32 = arith.constant 0 : i32
    %c0_i32_0 = arith.constant 0 : i32
    return %arg0, %c0_i32 : i32, i32
  }
  func.func @transform_1(%arg0: i32) -> (i32, i32) {
    %c0_i32 = arith.constant 0 : i32
    %c0_i32_0 = arith.constant 0 : i32
    %c0_i32_1 = arith.constant 0 : i32
    return %c0_i32, %c0_i32_0 : i32, i32
  }
  func.func @transform_2(%arg0: i32) -> (i32, i32) {
    %c0_i32 = arith.constant 0 : i32
    %c0_i32_0 = arith.constant 0 : i32
    %c0_i32_1 = arith.constant 0 : i32
    return %c0_i32, %c0_i32_0 : i32, i32
  }
  func.func @transform_3(%arg0: i32) -> (i32, i32) {
    %c0_i32 = arith.constant 0 : i32
    %c0_i32_0 = arith.constant 0 : i32
    %c0_i32_1 = arith.constant 0 : i32
    return %c0_i32, %c0_i32_0 : i32, i32
  }
  func.func @transform_4(%arg0: i32) -> (i32, i32) {
    %c0_i32 = arith.constant 0 : i32
    %c0_i32_0 = arith.constant 0 : i32
    %c0_i32_1 = arith.constant 0 : i32
    return %c0_i32, %c0_i32_0 : i32, i32
  }
  func.func @transform_5(%arg0: i32) -> (i32, i32) {
    %c0_i32 = arith.constant 0 : i32
    %c0_i32_0 = arith.constant 0 : i32
    %c0_i32_1 = arith.constant 0 : i32
    return %c0_i32, %c0_i32_0 : i32, i32
  }
  func.func @transform_6(%arg0: i32) -> (i32, i32) {
    %c0_i32 = arith.constant 0 : i32
    %c0_i32_0 = arith.constant 0 : i32
    %c0_i32_1 = arith.constant 0 : i32
    return %c0_i32, %c0_i32_0 : i32, i32
  }
  func.func @transform_7(%arg0: i32) -> (i32, i32) {
    %c0_i32 = arith.constant 0 : i32
    %c0_i32_0 = arith.constant 0 : i32
    %c0_i32_1 = arith.constant 0 : i32
    return %c0_i32, %c0_i32_0 : i32, i32
  }
  func.func @transform_8(%arg0: i32) -> (i32, i32) {
    %c0_i32 = arith.constant 0 : i32
    %c0_i32_0 = arith.constant 0 : i32
    %c0_i32_1 = arith.constant 0 : i32
    return %c0_i32, %c0_i32_0 : i32, i32
  }
  func.func @transform_9(%arg0: i32) -> (i32, i32) {
    %c0_i32 = arith.constant 0 : i32
    %c0_i32_0 = arith.constant 0 : i32
    return %arg0, %c0_i32 : i32, i32
  }
}

</mosaic_0001>

<llo_original>
// kernel: deep_forward.1
$region0: #{deep_forward.1}
  #allocation0 [shape = 'u32[]', space=smem, size = 0x4, offset = 0x4, fixed_abs, tag = 'smem constant byte address 0x4 - core index']
  #allocation1 [shape = 'u32[144,128]{1,0:T(1,128)}', space=vmem, size = 0x12000, scoped, tag = 'internal scratch']
  #allocation2 [shape = 'f32[1,1]{1,0:T(1,128)S(1)}', space=vmem, size = 0x200, scoped, tag = 'scoped memory for deep_forward.1']
  %s0 = inlined_call_operand.vmem [shape: bf16[8,24], index: 0, kind: input, shape index: {}]
  %s1 = inlined_call_operand.vmem [shape: bf16[24,128], index: 1, kind: input, shape index: {}]
  %s2 = inlined_call_operand.vmem [shape: f32[1,128], index: 2, kind: input, shape index: {}]
  %s3 = inlined_call_operand.vmem [shape: bf16[128,128], index: 3, kind: input, shape index: {}]
  %s4 = inlined_call_operand.vmem [shape: f32[1,128], index: 4, kind: input, shape index: {}]
  %s5 = inlined_call_operand.vmem [shape: bf16[128,128], index: 5, kind: input, shape index: {}]
  %s6 = inlined_call_operand.vmem [shape: f32[1,128], index: 6, kind: input, shape index: {}]
  %s7 = inlined_call_operand.vmem [shape: f32[1,128], index: 7, kind: input, shape index: {}]
  %s8 = inlined_call_operand.<no memory space> [shape: f32[1,1], index: 8, kind: input, shape index: {}]
  %s9 = inlined_call_operand.vmem [shape: f32[8,1], index: 9, kind: output, shape index: {}]
  %s10 = sld [smem:[#allocation0]]
  $region46: #{deep_forward.1} parent=0
    _
  %s12 = ssub.s32 1, %s10
  %s13 = scalar_select 0, %s12, %s10
  %v14 = vstv %s8
  %15 = vst [vmem:[#allocation2] sm:$0x1] %v14
  // Predicated region
  $region2: #{deep_forward.1} parent=0 // pred_check
    _
  $region3: #{deep_forward.1} parent=0 // pred_check_branch
    %17 = sbr.rel (0) target = $region5
  $region4: #{deep_forward.1} parent=0 // pred_region
    _
  $region5: #{deep_forward.1} parent=0 // pred_fallthru
    _
  // Predicated region
  $region6: #{deep_forward.1} parent=0 // pred_check
    _
  $region7: #{deep_forward.1} parent=0 // pred_check_branch
    %19 = sbr.rel (0) target = $region9
  $region8: #{deep_forward.1} parent=0 // pred_region
    _
  $region9: #{deep_forward.1} parent=0 // pred_fallthru
    _
  // Predicated region
  $region10: #{deep_forward.1} parent=0 // pred_check
    _
  $region11: #{deep_forward.1} parent=0 // pred_check_branch
    %21 = sbr.rel (0) target = $region13
  $region12: #{deep_forward.1} parent=0 // pred_region
    _
  $region13: #{deep_forward.1} parent=0 // pred_fallthru
    _
  // Predicated region
  $region14: #{deep_forward.1} parent=0 // pred_check
    _
  $region15: #{deep_forward.1} parent=0 // pred_check_branch
    %23 = sbr.rel (0) target = $region17
  $region16: #{deep_forward.1} parent=0 // pred_region
    _
  $region17: #{deep_forward.1} parent=0 // pred_fallthru
    _
  // Predicated region
  $region18: #{deep_forward.1} parent=0 // pred_check
    _
  $region19: #{deep_forward.1} parent=0 // pred_check_branch
    %25 = sbr.rel (0) target = $region21
  $region20: #{deep_forward.1} parent=0 // pred_region
    _
  $region21: #{deep_forward.1} parent=0 // pred_fallthru
    _
  // Predicated region
  $region22: #{deep_forward.1} parent=0 // pred_check
    _
  $region23: #{deep_forward.1} parent=0 // pred_check_branch
    %27 = sbr.rel (0) target = $region25
  $region24: #{deep_forward.1} parent=0 // pred_region
    _
  $region25: #{deep_forward.1} parent=0 // pred_fallthru
    _
  // Predicated region
  $region26: #{deep_forward.1} parent=0 // pred_check
    _
  $region27: #{deep_forward.1} parent=0 // pred_check_branch
    %29 = sbr.rel (0) target = $region29
  $region28: #{deep_forward.1} parent=0 // pred_region
    _
  $region29: #{deep_forward.1} parent=0 // pred_fallthru
    _
  // Predicated region
  $region30: #{deep_forward.1} parent=0 // pred_check
    _
  $region31: #{deep_forward.1} parent=0 // pred_check_branch
    %31 = sbr.rel (0) target = $region33
  $region32: #{deep_forward.1} parent=0 // pred_region
    _
  $region33: #{deep_forward.1} parent=0 // pred_fallthru
    _
  // Predicated region
  $region34: #{deep_forward.1} parent=0 // pred_check
    _
  $region35: #{deep_forward.1} parent=0 // pred_check_branch
    %33 = sbr.rel (0) target = $region37
  $region36: #{deep_forward.1} parent=0 // pred_region
    _
  $region37: #{deep_forward.1} parent=0 // pred_fallthru
    _
  %v35 = vld [vmem:[%s0] sm:$0xf]
  %v36 = vld [vmem:[%s1] sm:$0xf]
  %v37 = vld [vmem:[%s1 + $0x4] sm:$0xf]
  %v38 = vld [vmem:[%s1 + $0x8] sm:$0xf]
  %v39 = vld [vmem:[%s2] sm:$0x1]
  %v41 = vlaneseq
  %v42 = vshrl.u32 %v41, 7
  %v43 = vsub.s32 0, %v42
  %v44 = vrot.slane %v39, %v43
  %v49 = vunpack.c.l.b16 %v36
  %v50 = vunpack.c.l.b16 %v37
  %v51 = vunpack.c.l.b16 %v38
  %v52 = vpack.c.b16 %v50, %v49
  %v53 = vpack.c.b16 %v51, %v51
  %vm55 = vcmask 195584
  %v57 = vsel %vm55, %v35, 0
  %vm59 = vcmask 1043456
  %v61 = vsel %vm59, %v53, 0
  %63 = vmatprep.subr.bf16.mxu0 0
  %64 = vmatpush1.bf16.msra.mxu0 %v52
  %65 = vmatprep.subr.bf16.mxu0 0
  %66 = vmatpush1.bf16.msra.mxu0 %v61
  %67 = vmatprep.subr.bf16.mxu0 0
  %68 = vmatpush1.bf16.msra.mxu0 0
  %69 = vmatprep.subr.bf16.mxu0 0
  %70 = vmatpush1.bf16.msra.mxu0 0
  %71 = vmatprep.subr.bf16.mxu0 0
  %72 = vmatpush1.bf16.msra.mxu0 0
  %73 = vmatprep.subr.bf16.mxu0 0
  %74 = vmatpush1.bf16.msra.mxu0 0
  %75 = vmatprep.subr.bf16.mxu0 0
  %76 = vmatpush1.bf16.msra.mxu0 0
  %77 = vmatprep.subr.bf16.mxu0 0
  %78 = vmatpush1.bf16.msra.mxu0 0
  %79 = vmatprep.subr.bf16.mxu0 0
  %80 = vmatpush1.bf16.msra.mxu0 0
  %81 = vmatprep.subr.bf16.mxu0 0
  %82 = vmatpush1.bf16.msra.mxu0 0
  %83 = vmatprep.subr.bf16.mxu0 0
  %84 = vmatpush1.bf16.msra.mxu0 0
  %85 = vmatprep.subr.bf16.mxu0 0
  %86 = vmatpush1.bf16.msra.mxu0 0
  %87 = vmatprep.subr.bf16.mxu0 0
  %88 = vmatpush1.bf16.msra.mxu0 0
  %89 = vmatprep.subr.bf16.mxu0 0
  %90 = vmatpush1.bf16.msra.mxu0 0
  %91 = vmatprep.subr.bf16.mxu0 0
  %92 = vmatpush1.bf16.msra.mxu0 0
  %93 = vmatprep.subr.bf16.mxu0 0
  %94 = vmatpush1.bf16.msra.mxu0 0
  %95 = vmatprep.mubr.bf16.mxu0 0
  %96 = vmatmul.mubr.bf16.gmra.mrb[0].mxu0 %v57
  %v97 = vpop.f32.mrb[0].mxu0
  %v98 = vadd.f32 %v44, %v97
  %v99 = vpop.f32.mrb[0].mxu0
  %v100 = vpop.f32.mrb[0].mxu0
  %v101 = vpop.f32.mrb[0].mxu0
  %102 = vdwg.mxu0
  %v103 = vmax.f32 %v98, 0.0
  %v104 = vpack.c.bf16 %v103, %v103
  %v105 = vld [vmem:[%s3] sm:$0xf]
  %v106 = vld [vmem:[%s3 + $0x4] sm:$0xf]
  %v107 = vld [vmem:[%s3 + $0x8] sm:$0xf]
  %v108 = vld [vmem:[%s3 + $0xc] sm:$0xf]
  %v109 = vld [vmem:[%s3 + $0x10] sm:$0xf]
  %v110 = vld [vmem:[%s3 + $0x14] sm:$0xf]
  %v111 = vld [vmem:[%s3 + $0x18] sm:$0xf]
  %v112 = vld [vmem:[%s3 + $0x1c] sm:$0xf]
  %v113 = vld [vmem:[%s3 + $0x20] sm:$0xf]
  %v114 = vld [vmem:[%s3 + $0x24] sm:$0xf]
  %v115 = vld [vmem:[%s3 + $0x28] sm:$0xf]
  %v116 = vld [vmem:[%s3 + $0x2c] sm:$0xf]
  %v117 = vld [vmem:[%s3 + $0x30] sm:$0xf]
  %v118 = vld [vmem:[%s3 + $0x34] sm:$0xf]
  %v119 = vld [vmem:[%s3 + $0x38] sm:$0xf]
  %v120 = vld [vmem:[%s3 + $0x3c] sm:$0xf]
  %v121 = vld [vmem:[%s4] sm:$0x1]
  %v123 = vlaneseq
  %v124 = vshrl.u32 %v123, 7
  %v125 = vsub.s32 0, %v124
  %v126 = vrot.slane %v121, %v125
  %v144 = vunpack.c.l.b16 %v105
  %v145 = vunpack.c.l.b16 %v106
  %v146 = vunpack.c.l.b16 %v107
  %v147 = vunpack.c.l.b16 %v108
  %v148 = vunpack.c.l.b16 %v109
  %v149 = vunpack.c.l.b16 %v110
  %v150 = vunpack.c.l.b16 %v111
  %v151 = vunpack.c.l.b16 %v112
  %v152 = vunpack.c.l.b16 %v113
  %v153 = vunpack.c.l.b16 %v114
  %v154 = vunpack.c.l.b16 %v115
  %v155 = vunpack.c.l.b16 %v116
  %v156 = vunpack.c.l.b16 %v117
  %v157 = vunpack.c.l.b16 %v118
  %v158 = vunpack.c.l.b16 %v119
  %v159 = vunpack.c.l.b16 %v120
  %v160 = vpack.c.b16 %v145, %v144
  %v161 = vpack.c.b16 %v147, %v146
  %v162 = vpack.c.b16 %v149, %v148
  %v163 = vpack.c.b16 %v151, %v150
  %v164 = vpack.c.b16 %v153, %v152
  %v165 = vpack.c.b16 %v155, %v154
  %v166 = vpack.c.b16 %v157, %v156
  %v167 = vpack.c.b16 %v159, %v158
  %176 = vmatprep.subr.bf16.mxu0 0
  %177 = vmatpush1.bf16.msra.mxu0 %v160
  %178 = vmatprep.subr.bf16.mxu0 0
  %179 = vmatpush1.bf16.msra.mxu0 %v161
  %180 = vmatprep.subr.bf16.mxu0 0
  %181 = vmatpush1.bf16.msra.mxu0 %v162
  %182 = vmatprep.subr.bf16.mxu0 0
  %183 = vmatpush1.bf16.msra.mxu0 %v163
  %184 = vmatprep.subr.bf16.mxu0 0
  %185 = vmatpush1.bf16.msra.mxu0 %v164
  %186 = vmatprep.subr.bf16.mxu0 0
  %187 = vmatpush1.bf16.msra.mxu0 %v165
  %188 = vmatprep.subr.bf16.mxu0 0
  %189 = vmatpush1.bf16.msra.mxu0 %v166
  %190 = vmatprep.subr.bf16.mxu0 0
  %191 = vmatpush1.bf16.msra.mxu0 %v167
  %192 = vmatprep.subr.bf16.mxu0 0
  %193 = vmatpush1.bf16.msra.mxu0 0
  %194 = vmatprep.subr.bf16.mxu0 0
  %195 = vmatpush1.bf16.msra.mxu0 0
  %196 = vmatprep.subr.bf16.mxu0 0
  %197 = vmatpush1.bf16.msra.mxu0 0
  %198 = vmatprep.subr.bf16.mxu0 0
  %199 = vmatpush1.bf16.msra.mxu0 0
  %200 = vmatprep.subr.bf16.mxu0 0
  %201 = vmatpush1.bf16.msra.mxu0 0
  %202 = vmatprep.subr.bf16.mxu0 0
  %203 = vmatpush1.bf16.msra.mxu0 0
  %204 = vmatprep.subr.bf16.mxu0 0
  %205 = vmatpush1.bf16.msra.mxu0 0
  %206 = vmatprep.subr.bf16.mxu0 0
  %207 = vmatpush1.bf16.msra.mxu0 0
  %208 = vmatprep.mubr.bf16.mxu0 0
  %209 = vmatmul.mubr.bf16.gmra.mrb[0].mxu0 %v104
  %v210 = vpop.f32.mrb[0].mxu0
  %v211 = vadd.f32 %v126, %v210
  %v212 = vpop.f32.mrb[0].mxu0
  %v213 = vpop.f32.mrb[0].mxu0
  %v214 = vpop.f32.mrb[0].mxu0
  %215 = vdwg.mxu0
  %v216 = vmax.f32 %v211, 0.0
  %v217 = vpack.c.bf16 %v216, %v216
  %v218 = vld [vmem:[%s5] sm:$0xf]
  %v219 = vld [vmem:[%s5 + $0x4] sm:$0xf]
  %v220 = vld [vmem:[%s5 + $0x8] sm:$0xf]
  %v221 = vld [vmem:[%s5 + $0xc] sm:$0xf]
  %v222 = vld [vmem:[%s5 + $0x10] sm:$0xf]
  %v223 = vld [vmem:[%s5 + $0x14] sm:$0xf]
  %v224 = vld [vmem:[%s5 + $0x18] sm:$0xf]
  %v225 = vld [vmem:[%s5 + $0x1c] sm:$0xf]
  %v226 = vld [vmem:[%s5 + $0x20] sm:$0xf]
  %v227 = vld [vmem:[%s5 + $0x24] sm:$0xf]
  %v228 = vld [vmem:[%s5 + $0x28] sm:$0xf]
  %v229 = vld [vmem:[%s5 + $0x2c] sm:$0xf]
  %v230 = vld [vmem:[%s5 + $0x30] sm:$0xf]
  %v231 = vld [vmem:[%s5 + $0x34] sm:$0xf]
  %v232 = vld [vmem:[%s5 + $0x38] sm:$0xf]
  %v233 = vld [vmem:[%s5 + $0x3c] sm:$0xf]
  %v234 = vld [vmem:[%s6] sm:$0x1]
  %v236 = vlaneseq
  %v237 = vshrl.u32 %v236, 7
  %v238 = vsub.s32 0, %v237
  %v239 = vrot.slane %v234, %v238
  %v257 = vunpack.c.l.b16 %v218
  %v258 = vunpack.c.l.b16 %v219
  %v259 = vunpack.c.l.b16 %v220
  %v260 = vunpack.c.l.b16 %v221
  %v261 = vunpack.c.l.b16 %v222
  %v262 = vunpack.c.l.b16 %v223
  %v263 = vunpack.c.l.b16 %v224
  %v264 = vunpack.c.l.b16 %v225
  %v265 = vunpack.c.l.b16 %v226
  %v266 = vunpack.c.l.b16 %v227
  %v267 = vunpack.c.l.b16 %v228
  %v268 = vunpack.c.l.b16 %v229
  %v269 = vunpack.c.l.b16 %v230
  %v270 = vunpack.c.l.b16 %v231
  %v271 = vunpack.c.l.b16 %v232
  %v272 = vunpack.c.l.b16 %v233
  %v273 = vpack.c.b16 %v258, %v257
  %v274 = vpack.c.b16 %v260, %v259
  %v275 = vpack.c.b16 %v262, %v261
  %v276 = vpack.c.b16 %v264, %v263
  %v277 = vpack.c.b16 %v266, %v265
  %v278 = vpack.c.b16 %v268, %v267
  %v279 = vpack.c.b16 %v270, %v269
  %v280 = vpack.c.b16 %v272, %v271
  %289 = vmatprep.subr.bf16.mxu0 0
  %290 = vmatpush1.bf16.msra.mxu0 %v273
  %291 = vmatprep.subr.bf16.mxu0 0
  %292 = vmatpush1.bf16.msra.mxu0 %v274
  %293 = vmatprep.subr.bf16.mxu0 0
  %294 = vmatpush1.bf16.msra.mxu0 %v275
  %295 = vmatprep.subr.bf16.mxu0 0
  %296 = vmatpush1.bf16.msra.mxu0 %v276
  %297 = vmatprep.subr.bf16.mxu0 0
  %298 = vmatpush1.bf16.msra.mxu0 %v277
  %299 = vmatprep.subr.bf16.mxu0 0
  %300 = vmatpush1.bf16.msra.mxu0 %v278
  %301 = vmatprep.subr.bf16.mxu0 0
  %302 = vmatpush1.bf16.msra.mxu0 %v279
  %303 = vmatprep.subr.bf16.mxu0 0
  %304 = vmatpush1.bf16.msra.mxu0 %v280
  %305 = vmatprep.subr.bf16.mxu0 0
  %306 = vmatpush1.bf16.msra.mxu0 0
  %307 = vmatprep.subr.bf16.mxu0 0
  %308 = vmatpush1.bf16.msra.mxu0 0
  %309 = vmatprep.subr.bf16.mxu0 0
  %310 = vmatpush1.bf16.msra.mxu0 0
  %311 = vmatprep.subr.bf16.mxu0 0
  %312 = vmatpush1.bf16.msra.mxu0 0
  %313 = vmatprep.subr.bf16.mxu0 0
  %314 = vmatpush1.bf16.msra.mxu0 0
  %315 = vmatprep.subr.bf16.mxu0 0
  %316 = vmatpush1.bf16.msra.mxu0 0
  %317 = vmatprep.subr.bf16.mxu0 0
  %318 = vmatpush1.bf16.msra.mxu0 0
  %319 = vmatprep.subr.bf16.mxu0 0
  %320 = vmatpush1.bf16.msra.mxu0 0
  %321 = vmatprep.mubr.bf16.mxu0 0
  %322 = vmatmul.mubr.bf16.gmra.mrb[0].mxu0 %v217
  %v323 = vpop.f32.mrb[0].mxu0
  %v324 = vadd.f32 %v239, %v323
  %v325 = vpop.f32.mrb[0].mxu0
  %v326 = vpop.f32.mrb[0].mxu0
  %v327 = vpop.f32.mrb[0].mxu0
  %328 = vdwg.mxu0
  %v329 = vmax.f32 %v324, 0.0
  %v330 = vld [vmem:[%s7] sm:$0x1]
  %v332 = vlaneseq
  %v333 = vshrl.u32 %v332, 7
  %v334 = vsub.s32 0, %v333
  %v335 = vrot.slane %v330, %v334
  %v337 = vmul.f32 %v329, %v335
  %338 = vadd.xlane.f32.xlu0 %v337
  %v339 = vpop.xlane.xlu0 %338
  %v340 = vld [vmem:[#allocation2] sm:$0x1]
  %v342 = vlaneseq
  %v343 = vshrl.u32 %v342, 7
  %v344 = vsub.s32 0, %v343
  %v345 = vrot.slane %v340, %v344
  %v347 = vadd.f32 %v339, %v345
  %v348 = vmul.f32 %v347, 0.5
  %v349 = vtanh.pop %v348
  %v350 = vadd.f32 %v349, 1.0
  %v351 = vmul.f32 %v350, 0.5
  %vm352 = vcmask 7168
  %353 = vst.msk [vmem:[%s9] sm:$0xff] %vm352, %v351
  // Predicated region
  $region38: #{deep_forward.1} parent=0 // pred_check
    _
  $region39: #{deep_forward.1} parent=0 // pred_check_branch
    %355 = sbr.rel (0) target = $region41
  $region40: #{deep_forward.1} parent=0 // pred_region
    _
  $region41: #{deep_forward.1} parent=0 // pred_fallthru
    _
  // Predicated region
  $region42: #{deep_forward.1} parent=0 // pred_check
    _
  $region43: #{deep_forward.1} parent=0 // pred_check_branch
    %357 = sbr.rel (0) target = $region45
  $region44: #{deep_forward.1} parent=0 // pred_region
    _
  $region45: #{deep_forward.1} parent=0 // pred_fallthru
    _

</llo_original>
